<compile_context>
chip_gen: v7x
topology: tpu7x:2x2x1
jax: 0.10.0
libtpu: 0.0.40
codegen_flags: <defaults>
</compile_context>

<pallas_src>
import functools

import jax
import jax.numpy as jnp
from jax import lax
from jax.experimental import pallas as pl
from jax.experimental.pallas import tpu as pltpu

LANES = 128            # vreg lane width
SUBLANES = 8           # f32 sublanes per vreg
MAX_TILE_ROWS = 8192   # (8192, 128) f32 tile = 4 MiB per input per pipeline buffer
CHUNK_ROWS = 512       # in-kernel sub-chunk: (512, 128) f32 = 256 KiB working set
VMEM_LIMIT_BYTES = 48 * 1024 * 1024  # 2 in x 2 buf x 4 MiB = 16 MiB + headroom (< v7x 64 MiB)


def _cdiv(a, b):
    return -(-a // b)


def _device_num_shards():
    """Partial-sum shards == TensorCores per chip (2 on v7x, else 1)."""
    try:
        kind = jax.devices()[0].device_kind.lower()
    except Exception:
        return 1
    return 2 if ("v7" in kind or "tpu7" in kind) else 1


def _mse_partial_kernel(x_ref, t_ref, o_ref, acc_ref, *,
                        n_valid, tile_rows, bpc, need_mask):
    """Per-shard sum((x - t)^2), chunk-accumulated into an (8, 128) f32 scratch.

    Grid: (num_shards [core-parallel on v7x], bpc [reduction]).  The scratch
    accumulator persists across the reduction axis; the per-shard scalar is written
    once, under pl.when, on the last reduction step.
    """
    c = pl.program_id(0)   # shard (one per TensorCore on v7x)
    i = pl.program_id(1)   # reduction step within the shard

    @pl.when(i == 0)
    def _init():
        acc_ref[...] = jnp.zeros_like(acc_ref)
        o_ref[...] = jnp.zeros_like(o_ref)

    def _fold(sq, nrows):
        if nrows % SUBLANES == 0:
            # Fold into the (8, 128) accumulator with pure VPU adds (no XLU).
            acc_ref[...] += sq.reshape(nrows // SUBLANES, SUBLANES, LANES).sum(axis=0)
        else:
            # Odd row count (only possible for small single-block inputs).
            acc_ref[0:1, :] += jnp.sum(sq, axis=0, keepdims=True)

    def _accum(row_start, nrows, masked, base):
        x = x_ref[pl.ds(row_start, nrows), :].astype(jnp.float32)
        t = t_ref[pl.ds(row_start, nrows), :].astype(jnp.float32)
        d = x - t
        sq = d * d
        if masked:
            rid = lax.broadcasted_iota(jnp.int32, (nrows, LANES), 0)
            lid = lax.broadcasted_iota(jnp.int32, (nrows, LANES), 1)
            lin = base + row_start * LANES + rid * LANES + lid
            sq = jnp.where(lin < n_valid, sq, 0.0)
        _fold(sq, nrows)

    n_full = tile_rows // CHUNK_ROWS
    rem = tile_rows - n_full * CHUNK_ROWS

    def _sweep(masked, base=0):
        if n_full > 0:
            @pl.loop(0, n_full)
            def _(j):
                _accum(pl.multiple_of(j * CHUNK_ROWS, CHUNK_ROWS), CHUNK_ROWS,
                       masked, base)
        if rem > 0:
            _accum(n_full * CHUNK_ROWS, rem, masked, base)

    if not need_mask:
        _sweep(False)
    else:
        tile_elems = tile_rows * LANES
        # Logical block index (overhang blocks are clamped by the index_map, but
        # their logical base is >= n_valid so every element is masked out).
        # NOTE: int32 offsets — fine for < 2^31 elements (typical content features).
        base = (c * bpc + i) * tile_elems
        is_ragged = (base + tile_elems) > n_valid

        @pl.when(jnp.logical_not(is_ragged))
        def _full_block():
            _sweep(False)

        @pl.when(is_ragged)
        def _ragged_block():
            _sweep(True, base)

    @pl.when(i == bpc - 1)
    def _finalize():
        # Single cross-lane/sublane reduce per shard (XLU, one-shot).
        o_ref[...] = jnp.sum(acc_ref[...], keepdims=True)


def _prepare_2d(a):
    """Flatten to a lane-dense (rows, 128) slab.

    When numel % 128 == 0 (typical conv feature maps) this is a pure reshape (zero
    copy).  Otherwise the flat vector is zero-padded up to a multiple of 8*128; since
    both x and the target are zero-padded, the pad contributes exactly 0 to the sum.
    """
    flat = a.reshape(-1)
    n = flat.shape[0]
    if n % LANES != 0:
        chunk = SUBLANES * LANES
        padded = _cdiv(n, chunk) * chunk
        flat = jnp.pad(flat, (0, padded - n))
    return flat.reshape(-1, LANES), n


def _mse_sq_sum(x2d, t2d):
    """sum((x - t)^2) over two identically shaped (rows, 128) slabs."""
    assert x2d.shape == t2d.shape, (x2d.shape, t2d.shape)
    rows = x2d.shape[0]
    n_valid = rows * LANES

    # Tile size: whole slab if it fits one tile, else 8192 rows (4 MiB f32 / input).
    tile_rows = rows if rows <= MAX_TILE_ROWS else MAX_TILE_ROWS
    total_blocks = _cdiv(rows, tile_rows)
    num_shards = min(_device_num_shards(), total_blocks)
    bpc = _cdiv(total_blocks, num_shards)               # reduction steps per shard
    coverage = num_shards * bpc * tile_rows * LANES     # elements logically covered
    need_mask = coverage > n_valid                      # partial last block / overhang

    kernel = functools.partial(
        _mse_partial_kernel,
        n_valid=n_valid, tile_rows=tile_rows, bpc=bpc, need_mask=need_mask)

    if num_shards * bpc > total_blocks:
        # Overhang blocks (logical index >= total_blocks) are clamped onto the last
        # real block; their contribution is fully masked inside the kernel because
        # their logical base offset is >= n_valid.
        def in_map(c, i):
            return (jnp.minimum(c * bpc + i, total_blocks - 1), 0)
    else:
        def in_map(c, i):
            return (c * bpc + i, 0)

    if num_shards > 1 and hasattr(pltpu, "CORE_PARALLEL"):
        # Explicit cross-TensorCore split on multi-TC chips (v7x).
        dim_sem = (pltpu.CORE_PARALLEL, pltpu.ARBITRARY)
    elif num_shards > 1:
        dim_sem = ("parallel", "arbitrary")
    else:
        dim_sem = ("arbitrary", "arbitrary")

    partials = pl.pallas_call(
        kernel,
        out_shape=jax.ShapeDtypeStruct((num_shards, 1, 1), jnp.float32),
        grid_spec=pltpu.PrefetchScalarGridSpec(
            num_scalar_prefetch=0,
            grid=(num_shards, bpc),
            in_specs=[
                # pipeline_mode=pl.Buffered(3) is a possible few-% tweak once tile
                # size is final; skipped to keep the VMEM plan comfortable on v7x.
                pl.BlockSpec((tile_rows, LANES), in_map),
                pl.BlockSpec((tile_rows, LANES), in_map),
            ],
            out_specs=pl.BlockSpec((None, 1, 1), lambda c, i: (c, 0, 0)),
            scratch_shapes=[pltpu.VMEM((SUBLANES, LANES), jnp.float32)],
        ),
        compiler_params=pltpu.CompilerParams(
            dimension_semantics=dim_sem,
            vmem_limit_bytes=VMEM_LIMIT_BYTES,
        ),
    )(x2d, t2d)

    # num_shards (<= 2) scalars left to add — everything else was reduced in-kernel.
    return jnp.sum(partials)


@jax.jit
def _loss_from_prepared(x, t2d):
    x2d, n = _prepare_2d(x)
    return (_mse_sq_sum(x2d, t2d) / jnp.float32(n)).astype(jnp.float32)


def content_loss(x, target):
    """Functional equivalent of nn.MSELoss()(x, target): mean squared error."""
    x = jnp.asarray(x)
    target = jnp.asarray(target)
    if x.shape != target.shape:
        raise ValueError(f"shape mismatch: {x.shape} vs {target.shape}")
    t2d, _ = _prepare_2d(target)
    return _loss_from_prepared(x, t2d)


class ContentLossPallas:
    """Mirror of the PyTorch ContentLoss module: MSE against a fixed target.

    `target_dtype=jnp.bfloat16` optionally stores the fixed target in bf16, halving
    its HBM stream (the kernel always accumulates in f32).  Default keeps the
    target's dtype for exact parity with the f32 reference.
    """

    def __init__(self, content, target_dtype=None):
        target = jnp.asarray(content)
        self._shape = target.shape
        if target_dtype is not None:
            target = target.astype(target_dtype)
        # Prepare the fixed target once (flatten / reshape / optional zero-pad).
        self._t2d, self._n = _prepare_2d(target)

    def __call__(self, x):
        x = jnp.asarray(x)
        if x.shape != self._shape:
            raise ValueError(f"shape mismatch: {x.shape} vs target {self._shape}")
        return _loss_from_prepared(x, self._t2d)


if __name__ == "__main__":
    root = jax.random.PRNGKey(0)

    def run_case(seed, shape, dtype):
        kx, kt = jax.random.split(jax.random.fold_in(root, seed))
        x = jax.random.normal(kx, shape, dtype=jnp.float32).astype(dtype)
        t = jax.random.normal(kt, shape, dtype=jnp.float32).astype(dtype)
        loss = jax.block_until_ready(ContentLossPallas(t)(x))
        ref = jnp.mean((x.astype(jnp.float32) - t.astype(jnp.float32)) ** 2)
        assert jnp.allclose(loss, ref, rtol=5e-5, atol=1e-6), (shape, dtype, loss, ref)

    # Primary case (matches the PyTorch module's typical NCHW usage).
    run_case(0, (2, 4, 16, 16), jnp.float32)
    # Ragged element count (not a multiple of 128): zero-pad path (no mask needed).
    run_case(1, (2, 3, 15, 17), jnp.float32)
    # Large single block: chunked pl.loop accumulation.
    run_case(2, (4, 10, 128, 128), jnp.float32)
    # bf16 activations streamed directly (f32 accumulation inside the kernel).
    run_case(3, (2, 4, 16, 16), jnp.bfloat16)
    # Row count not a multiple of 8 (odd-tile fold path).
    run_case(4, (1, 1, 17, 128), jnp.float32)
    # Multi-block with a partial (ragged) last block: in-kernel masking path.
    run_case(5, (4, 16, 128, 129), jnp.float32)
    # Multi-block aligned: accumulator persists across several grid steps.
    run_case(6, (8, 32, 128, 128), jnp.float32)

    print("KERNEL_OK")
</pallas_src>

<mosaic_0001>
module attributes {stable_mosaic.version = 11 : i64} {
  func.func @_mse_partial_kernel(%arg0: i32, %arg1: i32, %arg2: memref<16x128xf32, #tpu.memory_space<vmem>>, %arg3: memref<16x128xf32, #tpu.memory_space<vmem>>, %arg4: memref<1x1x1xf32, #tpu.memory_space<vmem>>, %arg5: memref<8x128xf32, #tpu.memory_space<vmem>>) attributes {dimension_semantics = [#tpu.dimension_semantics<arbitrary>, #tpu.dimension_semantics<arbitrary>], iteration_bounds = array<i64: 1, 1>, scalar_prefetch = 0 : i64, scratch_operands = 1 : i64, tpu.core_type = #tpu.core_type<tc>, window_params = [{transform_indices = @transform_0, window_bounds = array<i64: 16, 128>}, {transform_indices = @transform_1, window_bounds = array<i64: 16, 128>}, {transform_indices = @transform_2, window_bounds = array<i64: 1, 1, 1>}]} {
    %c0_i32 = arith.constant 0 : i32
    %0 = arith.cmpi eq, %arg1, %c0_i32 : i32
    %1 = arith.extui %0 : i1 to i32
    %c0_i32_0 = arith.constant 0 : i32
    %2 = arith.cmpi ne, %1, %c0_i32_0 : i32
    scf.if %2 {
      %cst_10 = arith.constant 0.000000e+00 : f32
      %15 = vector.broadcast %cst_10 : f32 to vector<8x128xf32>
      %c0_11 = arith.constant 0 : index
      %c0_12 = arith.constant 0 : index
      %16 = vector.load %arg5[%c0_11, %c0_12] : memref<8x128xf32, #tpu.memory_space<vmem>>, vector<8x128xf32>
      tpu.vector_store %arg5[%c0_11, %c0_12], %15 {strides = array<i32>} : memref<8x128xf32, #tpu.memory_space<vmem>>, vector<8x128xf32>,
      %cst_13 = arith.constant 0.000000e+00 : f32
      %17 = vector.broadcast %cst_13 : f32 to vector<1x1xf32>
      %c0_14 = arith.constant 0 : index
      %c0_15 = arith.constant 0 : index
      %c0_16 = arith.constant 0 : index
      %18 = vector.load %arg4[%c0_14, %c0_15, %c0_16] : memref<1x1x1xf32, #tpu.memory_space<vmem>>, vector<1x1x1xf32>
      %19 = vector.shape_cast %18 : vector<1x1x1xf32> to vector<1x1xf32>
      %20 = vector.shape_cast %17 : vector<1x1xf32> to vector<1x1x1xf32>
      tpu.vector_store %arg4[%c0_14, %c0_15, %c0_16], %20 {strides = array<i32>} : memref<1x1x1xf32, #tpu.memory_space<vmem>>, vector<1x1x1xf32>,
    } else {
    }
    %c0 = arith.constant 0 : index
    %c0_1 = arith.constant 0 : index
    %3 = vector.load %arg2[%c0, %c0_1] : memref<16x128xf32, #tpu.memory_space<vmem>>, vector<16x128xf32>
    %c0_2 = arith.constant 0 : index
    %c0_3 = arith.constant 0 : index
    %4 = vector.load %arg3[%c0_2, %c0_3] : memref<16x128xf32, #tpu.memory_space<vmem>>, vector<16x128xf32>
    %5 = arith.subf %3, %4 : vector<16x128xf32>
    %6 = arith.mulf %5, %5 : vector<16x128xf32>
    %c0_4 = arith.constant 0 : index
    %c0_5 = arith.constant 0 : index
    %7 = vector.load %arg5[%c0_4, %c0_5] : memref<8x128xf32, #tpu.memory_space<vmem>>, vector<8x128xf32>
    %8 = vector.shape_cast %6 : vector<16x128xf32> to vector<2x8x128xf32>
    %cst = arith.constant dense<0.000000e+00> : vector<8x128xf32>
    %9 = vector.multi_reduction <add>, %8, %cst [0] : vector<2x8x128xf32> to vector<8x128xf32>
    %10 = arith.addf %7, %9 : vector<8x128xf32>
    %c0_6 = arith.constant 0 : index
    %c0_7 = arith.constant 0 : index
    %11 = vector.load %arg5[%c0_6, %c0_7] : memref<8x128xf32, #tpu.memory_space<vmem>>, vector<8x128xf32>
    tpu.vector_store %arg5[%c0_6, %c0_7], %10 {strides = array<i32>} : memref<8x128xf32, #tpu.memory_space<vmem>>, vector<8x128xf32>,
    %c0_i32_8 = arith.constant 0 : i32
    %12 = arith.cmpi eq, %arg1, %c0_i32_8 : i32
    %13 = arith.extui %12 : i1 to i32
    %c0_i32_9 = arith.constant 0 : i32
    %14 = arith.cmpi ne, %13, %c0_i32_9 : i32
    scf.if %14 {
      %c0_10 = arith.constant 0 : index
      %c0_11 = arith.constant 0 : index
      %15 = vector.load %arg5[%c0_10, %c0_11] : memref<8x128xf32, #tpu.memory_space<vmem>>, vector<8x128xf32>
      %16 = vector.shape_cast %15 : vector<8x128xf32> to vector<1x8x128xf32>
      %cst_12 = arith.constant dense<0.000000e+00> : vector<1xf32>
      %17 = vector.multi_reduction <add>, %16, %cst_12 [1, 2] : vector<1x8x128xf32> to vector<1xf32>
      %18 = vector.shape_cast %17 : vector<1xf32> to vector<1x1x1xf32>
      %19 = vector.extract %18[0, 0, 0] : f32 from vector<1x1x1xf32>
      %20 = vector.broadcast %19 : f32 to vector<1x1xf32>
      %c0_13 = arith.constant 0 : index
      %c0_14 = arith.constant 0 : index
      %c0_15 = arith.constant 0 : index
      %21 = vector.load %arg4[%c0_13, %c0_14, %c0_15] : memref<1x1x1xf32, #tpu.memory_space<vmem>>, vector<1x1x1xf32>
      %22 = vector.shape_cast %21 : vector<1x1x1xf32> to vector<1x1xf32>
      %23 = vector.shape_cast %20 : vector<1x1xf32> to vector<1x1x1xf32>
      tpu.vector_store %arg4[%c0_13, %c0_14, %c0_15], %23 {strides = array<i32>} : memref<1x1x1xf32, #tpu.memory_space<vmem>>, vector<1x1x1xf32>,
    } else {
    }
    return
  }
  func.func @transform_0(%arg0: i32, %arg1: i32) -> (i32, i32) {
    %c1_i32 = arith.constant 1 : i32
    %0 = arith.muli %arg0, %c1_i32 : i32
    %1 = arith.addi %0, %arg1 : i32
    %c0_i32 = arith.constant 0 : i32
    %c0_i32_0 = arith.constant 0 : i32
    return %1, %c0_i32 : i32, i32
  }
  func.func @transform_1(%arg0: i32, %arg1: i32) -> (i32, i32) {
    %c1_i32 = arith.constant 1 : i32
    %0 = arith.muli %arg0, %c1_i32 : i32
    %1 = arith.addi %0, %arg1 : i32
    %c0_i32 = arith.constant 0 : i32
    %c0_i32_0 = arith.constant 0 : i32
    return %1, %c0_i32 : i32, i32
  }
  func.func @transform_2(%arg0: i32, %arg1: i32) -> (i32, i32, i32) {
    %c0_i32 = arith.constant 0 : i32
    %c0_i32_0 = arith.constant 0 : i32
    %c0_i32_1 = arith.constant 0 : i32
    return %arg0, %c0_i32, %c0_i32_0 : i32, i32, i32
  }
}

</mosaic_0001>

<llo_original>
// kernel: _loss_from_prepared.1
$region0: #{_loss_from_prepared.1}
  #allocation0 [shape = 'u32[]', space=smem, size = 0x4, offset = 0x4, fixed_abs, tag = 'smem constant byte address 0x4 - core index']
  #allocation1 [shape = 'u32[144,128]{1,0:T(1,128)}', space=vmem, size = 0x12000, scoped, tag = 'internal scratch']
  #allocation2 [shape = 'f32[8,128]{1,0:T(8,128)}', space=vmem, size = 0x1000, scoped, tag = 'scratch operand']
  %s0 = inlined_call_operand.vmem [shape: f32[16,128], index: 0, kind: input, shape index: {}]
  %s1 = inlined_call_operand.vmem [shape: f32[16,128], index: 1, kind: input, shape index: {}]
  %s2 = inlined_call_operand.hbm [shape: f32[1,1,1], index: 2, kind: output, shape index: {}]
  %s3 = sld [smem:[#allocation0]]
  $region26: #{_loss_from_prepared.1} parent=0
    _
  %s5 = ssub.s32 1, %s3
  %s6 = scalar_select 0, %s5, %s3
  $region1: #{_loss_from_prepared.1} parent=0
    #allocation3 [shape = 'u8[512]{0}', space=vmem, size = 0x400, scoped, tag = 'output window, operand 0, single buffered']
    #allocation4 [shape = 's32[1]{0}', space=sflag, size = 0x4, scoped, tag = 'scoped memory for _loss_from_prepared.1']
    %7 = vsyncpa [#allocation4], 0
    // Predicated region
    $region2: #{_loss_from_prepared.1} parent=1 // pred_check
      _
    $region3: #{_loss_from_prepared.1} parent=1 // pred_check_branch
      %9 = sbr.rel (0) target = $region5
    $region4: #{_loss_from_prepared.1} parent=1 // pred_region
      %s10 = sadd.s32 0, 0
      %s11 = smul.u32 2, %s10
      %p12 = scmp.lt.s32.totalorder %s11, 1
      %s13 = scalar_select %p12, %s11, 1
      %s14 = smul.addr %s13, 8
      %s15 = scalar_lea.vmem %s0, %s14
      %s16 = sadd.s32 0, 0
      %s17 = smul.u32 2, %s16
    $region5: #{_loss_from_prepared.1} parent=1 // pred_fallthru
      _
    // Predicated region
    $region6: #{_loss_from_prepared.1} parent=1 // pred_check
      _
    $region7: #{_loss_from_prepared.1} parent=1 // pred_check_branch
      %19 = sbr.rel (0) target = $region9
    $region8: #{_loss_from_prepared.1} parent=1 // pred_region
      %s20 = sadd.s32 0, 0
      %s21 = smul.u32 2, %s20
      %p22 = scmp.lt.s32.totalorder %s21, 1
      %s23 = scalar_select %p22, %s21, 1
      %s24 = smul.addr %s23, 8
      %s25 = scalar_lea.vmem %s1, %s24
      %s26 = sadd.s32 0, 0
      %s27 = smul.u32 2, %s26
    $region9: #{_loss_from_prepared.1} parent=1 // pred_fallthru
      _
    %s28 = sadd.s32 0, 0
    %s29 = smul.u32 2, %s28
    %p30 = scmp.lt.s32.totalorder %s29, 1
    %s31 = scalar_select %p30, %s29, 1
    %s32 = smul.addr %s31, 8
    %s33 = scalar_lea.vmem %s0, %s32
    %s34 = sadd.s32 0, 0
    %s35 = smul.u32 2, %s34
    %p36 = scmp.lt.s32.totalorder %s35, 1
    %s37 = scalar_select %p36, %s35, 1
    %s38 = smul.addr %s37, 8
    %s39 = scalar_lea.vmem %s1, %s38
    %s40 = sadd.s32 0, 0
    %s41 = smul.u32 2, %s40
    %p42 = scmp.lt.s32.totalorder %s41, 1
    %s43 = scalar_select %p42, %s41, 1
    %s44 = smul.addr %s43, 8
    %s45 = scalar_lea.vmem %s0, %s44
    %s46 = sadd.s32 0, 0
    %s47 = smul.u32 2, %s46
    %s48 = sadd.s32 0, 0
    %s49 = smul.u32 2, %s48
    %p50 = scmp.lt.s32.totalorder %s49, 1
    %s51 = scalar_select %p50, %s49, 1
    %s52 = smul.addr %s51, 8
    %s53 = scalar_lea.vmem %s1, %s52
    %s54 = sadd.s32 0, 0
    %s55 = smul.u32 2, %s54
    %p56 = scmp.eq.s32.totalorder 0, 0
    // Predicated region
    $region10: #{_loss_from_prepared.1} parent=1 // pred_check
      %p57 = pneg %p56
    $region11: #{_loss_from_prepared.1} parent=1 // pred_check_branch
      %59 = sbr.rel (%p57) target = $region13
    $region12: #{_loss_from_prepared.1} parent=1 // pred_region
      %60 = vst [vmem:[#allocation2] sm:$0xff] 0.0
      %vm61 = vcmask 0
      %62 = vst.msk [vmem:[#allocation3] sm:$0x1] %vm61, 0.0
    $region13: #{_loss_from_prepared.1} parent=1 // pred_fallthru
      _
    %v63 = vld [vmem:[%s45] sm:$0xff]
    %v64 = vld [vmem:[%s45 + $0x8] sm:$0xff]
    %v65 = vld [vmem:[%s53] sm:$0xff]
    %v66 = vld [vmem:[%s53 + $0x8] sm:$0xff]
    %v67 = vsub.f32 %v63, %v65
    %v68 = vsub.f32 %v64, %v66
    %v69 = vmul.f32 %v67, %v67
    %v70 = vmul.f32 %v68, %v68
    %v71 = vld [vmem:[#allocation2] sm:$0xff]
    %v72 = vadd.f32 %v69, %v70
    %v73 = vadd.f32 %v71, %v72
    %74 = vst [vmem:[#allocation2] sm:$0xff] %v73
    // Predicated region
    $region14: #{_loss_from_prepared.1} parent=1 // pred_check
      %p75 = pneg %p56
    $region15: #{_loss_from_prepared.1} parent=1 // pred_check_branch
      %77 = sbr.rel (%p75) target = $region17
    $region16: #{_loss_from_prepared.1} parent=1 // pred_region
      %v78 = vld [vmem:[#allocation2] sm:$0xff]
      %79 = vadd.xlane.f32.xlu0 %v78
      %v80 = vpop.xlane.xlu0 %79
      %v81 = vrot.slane %v80, 4
      %v82 = vadd.f32 %v80, %v81
      %v83 = vrot.slane %v82, 2
      %v84 = vadd.f32 %v82, %v83
      %v85 = vrot.slane %v84, 1
      %v86 = vadd.f32 %v84, %v85
      %s87 = vtos %v86
      %v88 = vstv %s87
      %vm89 = vcmask 0
      %90 = vst.msk [vmem:[#allocation3] sm:$0x1] %vm89, %v88
    $region17: #{_loss_from_prepared.1} parent=1 // pred_fallthru
      _
    // Predicated region
    $region18: #{_loss_from_prepared.1} parent=1 // pred_check
      _
    $region19: #{_loss_from_prepared.1} parent=1 // pred_check_branch
      %92 = sbr.rel (0) target = $region21
    $region20: #{_loss_from_prepared.1} parent=1 // pred_region
      %s94 = ssub.s32 16, 16
      %95 = vsyncadd [#allocation4], %s94
      %s97 = sshll.u32 [#allocation3], 4
      %s98 = int_to_ptr.vmem [resolvable:$true] %s97
      %100 = dma.vmem_to_hbm [thread:$0]  %s98, 16, %s2, [#allocation4]
    $region21: #{_loss_from_prepared.1} parent=1 // pred_fallthru
      _
    // Predicated region
    $region22: #{_loss_from_prepared.1} parent=1 // pred_check
      _
    $region23: #{_loss_from_prepared.1} parent=1 // pred_check_branch
      %102 = sbr.rel (0) target = $region25
    $region24: #{_loss_from_prepared.1} parent=1 // pred_region
      %103 = dma.done [#allocation4], 16
    $region25: #{_loss_from_prepared.1} parent=1 // pred_fallthru
      _
    %104 = vsyncpa [#allocation4], 1

</llo_original>
